<compile_context>
chip_gen: v7x
topology: tpu7x:2x2x1
jax: 0.10.0
libtpu: 0.0.40
codegen_flags: <defaults>
</compile_context>

<pallas_src>
import jax
import jax.numpy as jnp
from jax.experimental import pallas as pl
from jax.experimental.pallas import tpu as pltpu

N_FEATURE = 32   # CONFIG['n_feature']
H1 = 30
H2 = 20
N_ACTION = 8     # CONFIG['n_action']

LANE = 128         # TPU lane width; padded matrices use 128 output lanes
SUBLANE_BF16 = 16  # bf16 sublane packing -> pad batch to a multiple of 16
MAX_TILE_B = 512   # batch tile; <1 MiB/step double-buffered, safe on all gens
NEG_INF = -1e30


def simplenet_kernel(x_ref, w_ref, b_ref, o_ref):
    """One batch tile of the fused 3-layer MLP + softmax.

    x_ref: (TILE_B, N_FEATURE) bf16 -- raw features (no lane padding)
    w_ref: (3, 128, 128) bf16       -- layer weights, (in, out) layout, zero padded
    b_ref: (3, 1, 128) f32          -- layer biases; b3's padded lanes hold -1e30
    o_ref: (TILE_B, 128) f32        -- softmax probs in lanes [0, N_ACTION), 0 elsewhere
    """
    x = x_ref[...]                                   # already bf16

    # fc1 + tanh (contract only the N_FEATURE valid rows of the weight slab;
    # padded output lanes stay exactly 0: zero weights, zero bias, tanh(0)=0)
    h1 = jnp.tanh(
        jnp.dot(x, w_ref[0, :N_FEATURE, :], preferred_element_type=jnp.float32)
        + b_ref[0]
    )
    # fc2 + tanh
    h2 = jnp.tanh(
        jnp.dot(h1.astype(jnp.bfloat16), w_ref[1],
                preferred_element_type=jnp.float32) + b_ref[1]
    )
    # fc3 logits; b3's padded lanes are -1e30 -> those lanes softmax to exact 0,
    # so no iota/where mask is needed.
    logits = (
        jnp.dot(h2.astype(jnp.bfloat16), w_ref[2],
                preferred_element_type=jnp.float32) + b_ref[2]
    )

    m = jnp.max(logits, axis=-1, keepdims=True)
    e = jnp.exp(logits - m)
    denom = jnp.sum(e, axis=-1, keepdims=True)
    o_ref[...] = e / denom                           # exact divide (cheap: (B,1) denom)


def _round_up(n, m):
    return ((n + m - 1) // m) * m


def _run_kernel(x_pad, w_packed, b_packed, tile_b):
    b_pad = x_pad.shape[0]
    grid = (b_pad // tile_b,)
    return pl.pallas_call(
        simplenet_kernel,
        out_shape=jax.ShapeDtypeStruct((b_pad, LANE), jnp.float32),
        grid=grid,
        in_specs=[
            # batch-tiled input: (TILE_B, 32) bf16 block, pipelined over the grid
            pl.BlockSpec((tile_b, N_FEATURE), lambda i: (i, 0)),
            # weights / biases: same block every step -> stay VMEM-resident
            pl.BlockSpec((3, LANE, LANE), lambda i: (0, 0, 0)),
            pl.BlockSpec((3, 1, LANE), lambda i: (0, 0, 0)),
        ],
        out_specs=pl.BlockSpec((tile_b, LANE), lambda i: (i, 0)),
        compiler_params=pltpu.CompilerParams(
            dimension_semantics=("parallel",)),      # v7x: shard batch over 2 TCs
    )(x_pad, w_packed, b_packed)


@jax.jit
def simplenet_forward_batched(xb, packed):
    """xb: (B, N_FEATURE) -> (B, N_ACTION) softmax rows."""
    w_packed, b_packed = packed
    B = xb.shape[0]
    tile_b = min(MAX_TILE_B, _round_up(B, SUBLANE_BF16))
    b_pad = _round_up(B, tile_b)
    x_bf16 = xb.astype(jnp.bfloat16)
    if b_pad != B:   # tiny (B,32) bf16 pad only when batch isn't tile-aligned
        x_bf16 = jnp.pad(x_bf16, ((0, b_pad - B), (0, 0)))
    out = _run_kernel(x_bf16, w_packed, b_packed, tile_b)
    return out[:B, :N_ACTION]


def simplenet_forward(x, packed):
    """Original module semantics: flatten to (1, -1), return (1, N_ACTION)."""
    x_row = jnp.reshape(jnp.asarray(x, jnp.float32), (1, -1))
    assert x_row.shape[1] == N_FEATURE, "n_feature mismatch"
    return simplenet_forward_batched(x_row, packed)


def init_params(key):
    """PyTorch-Linear-style uniform init; weights stored as (in, out)."""
    ks = jax.random.split(key, 6)

    def linear(kw, kb, fan_in, fan_out):
        bound = 1.0 / jnp.sqrt(jnp.float32(fan_in))
        w = jax.random.uniform(kw, (fan_in, fan_out), jnp.float32, -bound, bound)
        b = jax.random.uniform(kb, (fan_out,), jnp.float32, -bound, bound)
        return w, b

    w1, b1 = linear(ks[0], ks[1], N_FEATURE, H1)
    w2, b2 = linear(ks[2], ks[3], H1, H2)
    w3, b3 = linear(ks[4], ks[5], H2, N_ACTION)
    return (w1, b1, w2, b2, w3, b3)


def pack_params(params):
    """Pack the 6 tensors into two pre-padded slabs (done once, host side)."""
    w1, b1, w2, b2, w3, b3 = params

    def pad_w(w):
        out = jnp.zeros((LANE, LANE), jnp.float32)
        return out.at[: w.shape[0], : w.shape[1]].set(w)

    def pad_b(b, fill=0.0):
        b = jnp.reshape(b, (-1,))
        out = jnp.full((1, LANE), jnp.float32(fill))
        return out.at[0, : b.shape[0]].set(b)

    w_packed = jnp.stack([pad_w(w1), pad_w(w2), pad_w(w3)]).astype(jnp.bfloat16)
    # b3's padded lanes carry -1e30: the softmax mask is baked into the bias.
    b_packed = jnp.stack([pad_b(b1), pad_b(b2), pad_b(b3, fill=NEG_INF)])  # (3,1,128) f32
    return (w_packed, b_packed)


def reference_forward(xb, params):
    w1, b1, w2, b2, w3, b3 = params
    h1 = jnp.tanh(xb @ w1 + b1)
    h2 = jnp.tanh(h1 @ w2 + b2)
    return jax.nn.softmax(h2 @ w3 + b3, axis=-1)


if __name__ == "__main__":
    key = jax.random.PRNGKey(0)
    k_x, k_b, k_p = jax.random.split(key, 3)

    params = init_params(k_p)
    packed = pack_params(params)

    # 1) Module-semantics path: single feature vector -> (1, N_ACTION) softmax.
    x = jax.random.normal(k_x, (N_FEATURE,), dtype=jnp.float32)
    out1 = jax.block_until_ready(simplenet_forward(x, packed))
    assert out1.shape == (1, N_ACTION)
    assert abs(float(jnp.sum(out1)) - 1.0) < 1e-4  # exact divide; rows sum to 1

    # 2) Small batched path (exercises batch padding 2 -> 16).
    B = 2
    xb = jax.random.normal(k_b, (B, N_FEATURE), dtype=jnp.float32)
    outb = jax.block_until_ready(simplenet_forward_batched(xb, packed))
    assert outb.shape == (B, N_ACTION)

    ref = reference_forward(xb, params)
    assert float(jnp.max(jnp.abs(outb - ref))) < 5e-2        # bf16 matmul parity
    assert float(jnp.max(jnp.abs(jnp.sum(outb, axis=-1) - 1.0))) < 1e-4

    print("KERNEL_OK")
</pallas_src>

<mosaic_0001>
module attributes {stable_mosaic.version = 11 : i64} {
  func.func @simplenet_kernel(%arg0: i32, %arg1: memref<16x32xbf16, #tpu.memory_space<vmem>>, %arg2: memref<3x128x128xbf16, #tpu.memory_space<vmem>>, %arg3: memref<3x1x128xf32, #tpu.memory_space<vmem>>, %arg4: memref<16x128xf32, #tpu.memory_space<vmem>>) attributes {dimension_semantics = [#tpu.dimension_semantics<parallel>], iteration_bounds = array<i64: 1>, scalar_prefetch = 0 : i64, scratch_operands = 0 : i64, tpu.core_type = #tpu.core_type<tc>, window_params = [{transform_indices = @transform_0, window_bounds = array<i64: 16, 32>}, {pipeline_mode = #tpu.pipeline_mode<synchronous>, transform_indices = @transform_1, window_bounds = array<i64: 3, 128, 128>}, {pipeline_mode = #tpu.pipeline_mode<synchronous>, transform_indices = @transform_2, window_bounds = array<i64: 3, 1, 128>}, {transform_indices = @transform_3, window_bounds = array<i64: 16, 128>}]} {
    %c0 = arith.constant 0 : index
    %c0_0 = arith.constant 0 : index
    %0 = vector.load %arg1[%c0, %c0_0] : memref<16x32xbf16, #tpu.memory_space<vmem>>, vector<16x32xbf16>
    %c0_1 = arith.constant 0 : index
    %c0_2 = arith.constant 0 : index
    %c0_3 = arith.constant 0 : index
    %1 = vector.load %arg2[%c0_1, %c0_2, %c0_3] : memref<3x128x128xbf16, #tpu.memory_space<vmem>>, vector<1x32x128xbf16>
    %2 = vector.shape_cast %1 : vector<1x32x128xbf16> to vector<32x128xbf16>
    %cst = arith.constant dense<0.000000e+00> : vector<16x128xf32>
    %3 = tpu.matmul %0, %2, %cst {dimension_numbers = #tpu.dot_dimension_numbers<[1], [0], [0], [1], [0, 0, 1, 1], [], []>} : vector<16x32xbf16>, vector<32x128xbf16>, vector<16x128xf32> -> vector<16x128xf32>
    %c0_4 = arith.constant 0 : index
    %c0_5 = arith.constant 0 : index
    %c0_6 = arith.constant 0 : index
    %4 = vector.load %arg3[%c0_4, %c0_5, %c0_6] : memref<3x1x128xf32, #tpu.memory_space<vmem>>, vector<1x1x128xf32>
    %5 = vector.shape_cast %4 : vector<1x1x128xf32> to vector<1x128xf32>
    %6 = vector.broadcast %5 : vector<1x128xf32> to vector<16x128xf32>
    %7 = arith.addf %3, %6 : vector<16x128xf32>
    %8 = math.tanh %7 : vector<16x128xf32>
    %9 = arith.truncf %8 : vector<16x128xf32> to vector<16x128xbf16>
    %c1 = arith.constant 1 : index
    %c0_7 = arith.constant 0 : index
    %c0_8 = arith.constant 0 : index
    %10 = vector.load %arg2[%c1, %c0_7, %c0_8] : memref<3x128x128xbf16, #tpu.memory_space<vmem>>, vector<1x128x128xbf16>
    %11 = vector.shape_cast %10 : vector<1x128x128xbf16> to vector<128x128xbf16>
    %cst_9 = arith.constant dense<0.000000e+00> : vector<16x128xf32>
    %12 = tpu.matmul %9, %11, %cst_9 {dimension_numbers = #tpu.dot_dimension_numbers<[1], [0], [0], [1], [0, 0, 1, 1], [], []>} : vector<16x128xbf16>, vector<128x128xbf16>, vector<16x128xf32> -> vector<16x128xf32>
    %c1_10 = arith.constant 1 : index
    %c0_11 = arith.constant 0 : index
    %c0_12 = arith.constant 0 : index
    %13 = vector.load %arg3[%c1_10, %c0_11, %c0_12] : memref<3x1x128xf32, #tpu.memory_space<vmem>>, vector<1x1x128xf32>
    %14 = vector.shape_cast %13 : vector<1x1x128xf32> to vector<1x128xf32>
    %15 = vector.broadcast %14 : vector<1x128xf32> to vector<16x128xf32>
    %16 = arith.addf %12, %15 : vector<16x128xf32>
    %17 = math.tanh %16 : vector<16x128xf32>
    %18 = arith.truncf %17 : vector<16x128xf32> to vector<16x128xbf16>
    %c2 = arith.constant 2 : index
    %c0_13 = arith.constant 0 : index
    %c0_14 = arith.constant 0 : index
    %19 = vector.load %arg2[%c2, %c0_13, %c0_14] : memref<3x128x128xbf16, #tpu.memory_space<vmem>>, vector<1x128x128xbf16>
    %20 = vector.shape_cast %19 : vector<1x128x128xbf16> to vector<128x128xbf16>
    %cst_15 = arith.constant dense<0.000000e+00> : vector<16x128xf32>
    %21 = tpu.matmul %18, %20, %cst_15 {dimension_numbers = #tpu.dot_dimension_numbers<[1], [0], [0], [1], [0, 0, 1, 1], [], []>} : vector<16x128xbf16>, vector<128x128xbf16>, vector<16x128xf32> -> vector<16x128xf32>
    %c2_16 = arith.constant 2 : index
    %c0_17 = arith.constant 0 : index
    %c0_18 = arith.constant 0 : index
    %22 = vector.load %arg3[%c2_16, %c0_17, %c0_18] : memref<3x1x128xf32, #tpu.memory_space<vmem>>, vector<1x1x128xf32>
    %23 = vector.shape_cast %22 : vector<1x1x128xf32> to vector<1x128xf32>
    %24 = vector.broadcast %23 : vector<1x128xf32> to vector<16x128xf32>
    %25 = arith.addf %21, %24 : vector<16x128xf32>
    %cst_19 = arith.constant dense<0xFF800000> : vector<16xf32>
    %26 = vector.multi_reduction <maximumf>, %25, %cst_19 [1] : vector<16x128xf32> to vector<16xf32>
    %27 = vector.shape_cast %26 : vector<16xf32> to vector<16x1xf32>
    %28 = vector.broadcast %27 : vector<16x1xf32> to vector<16x128xf32>
    %29 = arith.subf %25, %28 : vector<16x128xf32>
    %30 = math.exp %29 : vector<16x128xf32>
    %cst_20 = arith.constant dense<0.000000e+00> : vector<16xf32>
    %31 = vector.multi_reduction <add>, %30, %cst_20 [1] : vector<16x128xf32> to vector<16xf32>
    %32 = vector.shape_cast %31 : vector<16xf32> to vector<16x1xf32>
    %33 = vector.broadcast %32 : vector<16x1xf32> to vector<16x128xf32>
    %34 = arith.divf %30, %33 : vector<16x128xf32>
    %c0_21 = arith.constant 0 : index
    %c0_22 = arith.constant 0 : index
    %35 = vector.load %arg4[%c0_21, %c0_22] : memref<16x128xf32, #tpu.memory_space<vmem>>, vector<16x128xf32>
    tpu.vector_store %arg4[%c0_21, %c0_22], %34 {strides = array<i32>} : memref<16x128xf32, #tpu.memory_space<vmem>>, vector<16x128xf32>,
    return
  }
  func.func @transform_0(%arg0: i32) -> (i32, i32) {
    %c0_i32 = arith.constant 0 : i32
    %c0_i32_0 = arith.constant 0 : i32
    return %arg0, %c0_i32 : i32, i32
  }
  func.func @transform_1(%arg0: i32) -> (i32, i32, i32) {
    %c0_i32 = arith.constant 0 : i32
    %c0_i32_0 = arith.constant 0 : i32
    %c0_i32_1 = arith.constant 0 : i32
    %c0_i32_2 = arith.constant 0 : i32
    return %c0_i32, %c0_i32_0, %c0_i32_1 : i32, i32, i32
  }
  func.func @transform_2(%arg0: i32) -> (i32, i32, i32) {
    %c0_i32 = arith.constant 0 : i32
    %c0_i32_0 = arith.constant 0 : i32
    %c0_i32_1 = arith.constant 0 : i32
    %c0_i32_2 = arith.constant 0 : i32
    return %c0_i32, %c0_i32_0, %c0_i32_1 : i32, i32, i32
  }
  func.func @transform_3(%arg0: i32) -> (i32, i32) {
    %c0_i32 = arith.constant 0 : i32
    %c0_i32_0 = arith.constant 0 : i32
    return %arg0, %c0_i32 : i32, i32
  }
}

</mosaic_0001>

<llo_original>
// kernel: simplenet_forward_batched.1
$region0: #{simplenet_forward_batched.1}
  #allocation0 [shape = 'u32[]', space=smem, size = 0x4, offset = 0x4, fixed_abs, tag = 'smem constant byte address 0x4 - core index']
  #allocation1 [shape = 'u32[144,128]{1,0:T(1,128)}', space=vmem, size = 0x12000, scoped, tag = 'internal scratch']
  %s0 = inlined_call_operand.vmem [shape: bf16[16,32], index: 0, kind: input, shape index: {}]
  %s1 = inlined_call_operand.hbm [shape: bf16[3,128,128], index: 1, kind: input, shape index: {}]
  %s2 = inlined_call_operand.vmem [shape: f32[3,1,128], index: 2, kind: input, shape index: {}]
  %s3 = inlined_call_operand.vmem [shape: f32[16,128], index: 3, kind: output, shape index: {}]
  %s4 = sld [smem:[#allocation0]]
  $region26: #{simplenet_forward_batched.1} parent=0
    _
  %s6 = ssub.s32 1, %s4
  %s7 = scalar_select 0, %s6, %s4
  $region1: #{simplenet_forward_batched.1} parent=0
    #allocation2 [shape = 'u8[98304]{0}', space=vmem, size = 0x18000, scoped, tag = 'input window, operand 1, single buffered']
    #allocation3 [shape = 's32[1]{0}', space=sflag, size = 0x4, scoped, tag = 'scoped memory for simplenet_forward_batched.1']
    %8 = vsyncpa [#allocation3], 0
    // Predicated region
    $region2: #{simplenet_forward_batched.1} parent=1 // pred_check
      _
    $region3: #{simplenet_forward_batched.1} parent=1 // pred_check_branch
      %10 = sbr.rel (0) target = $region5
    $region4: #{simplenet_forward_batched.1} parent=1 // pred_region
      _
    $region5: #{simplenet_forward_batched.1} parent=1 // pred_fallthru
      _
    // Predicated region
    $region6: #{simplenet_forward_batched.1} parent=1 // pred_check
      _
    $region7: #{simplenet_forward_batched.1} parent=1 // pred_check_branch
      %12 = sbr.rel (0) target = $region9
    $region8: #{simplenet_forward_batched.1} parent=1 // pred_region
      %s14 = ssub.s32 3072, 3072
      %15 = vsyncadd [#allocation3], %s14
      %s16 = sshll.u32 [#allocation2], 4
      %s17 = int_to_ptr.vmem [resolvable:$true] %s16
      %22 = dma.hbm_to_vmem [thread:$0]  %s1, 3072, %s17, [#allocation3], 64, 64, 4
    $region9: #{simplenet_forward_batched.1} parent=1 // pred_fallthru
      _
    // Predicated region
    $region10: #{simplenet_forward_batched.1} parent=1 // pred_check
      _
    $region11: #{simplenet_forward_batched.1} parent=1 // pred_check_branch
      %24 = sbr.rel (0) target = $region13
    $region12: #{simplenet_forward_batched.1} parent=1 // pred_region
      _
    $region13: #{simplenet_forward_batched.1} parent=1 // pred_fallthru
      _
    // Predicated region
    $region14: #{simplenet_forward_batched.1} parent=1 // pred_check
      _
    $region15: #{simplenet_forward_batched.1} parent=1 // pred_check_branch
      %26 = sbr.rel (0) target = $region17
    $region16: #{simplenet_forward_batched.1} parent=1 // pred_region
      %27 = dma.done [#allocation3], 3072
    $region17: #{simplenet_forward_batched.1} parent=1 // pred_fallthru
      _
    %v29 = vld [vmem:[%s0] sm:$0xf]
    %v30 = vld [vmem:[%s0 + $0x4] sm:$0xf]
    %v31 = vld [vmem:[#allocation2] sm:$0xf]
    %v32 = vld [vmem:[#allocation2 + $0x4] sm:$0xf]
    %v33 = vld [vmem:[#allocation2 + $0x8] sm:$0xf]
    %v34 = vld [vmem:[#allocation2 + $0xc] sm:$0xf]
    %v35 = vld [vmem:[%s2] sm:$0x1]
    %v37 = vlaneseq
    %v38 = vshrl.u32 %v37, 7
    %v39 = vsub.s32 0, %v38
    %v40 = vrot.slane %v35, %v39
    %v44 = vunpack.c.l.b16 %v29
    %v45 = vunpack.c.l.b16 %v30
    %v46 = vpack.c.b16 %v45, %v44
    %v51 = vunpack.c.l.b16 %v31
    %v52 = vunpack.c.l.b16 %v32
    %v53 = vunpack.c.l.b16 %v33
    %v54 = vunpack.c.l.b16 %v34
    %v55 = vpack.c.b16 %v52, %v51
    %v56 = vpack.c.b16 %v54, %v53
    %vm59 = vcmask 261120
    %v61 = vsel %vm59, %v46, 0
    %63 = vmatprep.subr.bf16.mxu0 0
    %64 = vmatpush1.bf16.msra.mxu0 %v55
    %65 = vmatprep.subr.bf16.mxu0 0
    %66 = vmatpush1.bf16.msra.mxu0 %v56
    %67 = vmatprep.subr.bf16.mxu0 0
    %68 = vmatpush1.bf16.msra.mxu0 0
    %69 = vmatprep.subr.bf16.mxu0 0
    %70 = vmatpush1.bf16.msra.mxu0 0
    %71 = vmatprep.subr.bf16.mxu0 0
    %72 = vmatpush1.bf16.msra.mxu0 0
    %73 = vmatprep.subr.bf16.mxu0 0
    %74 = vmatpush1.bf16.msra.mxu0 0
    %75 = vmatprep.subr.bf16.mxu0 0
    %76 = vmatpush1.bf16.msra.mxu0 0
    %77 = vmatprep.subr.bf16.mxu0 0
    %78 = vmatpush1.bf16.msra.mxu0 0
    %79 = vmatprep.subr.bf16.mxu0 0
    %80 = vmatpush1.bf16.msra.mxu0 0
    %81 = vmatprep.subr.bf16.mxu0 0
    %82 = vmatpush1.bf16.msra.mxu0 0
    %83 = vmatprep.subr.bf16.mxu0 0
    %84 = vmatpush1.bf16.msra.mxu0 0
    %85 = vmatprep.subr.bf16.mxu0 0
    %86 = vmatpush1.bf16.msra.mxu0 0
    %87 = vmatprep.subr.bf16.mxu0 0
    %88 = vmatpush1.bf16.msra.mxu0 0
    %89 = vmatprep.subr.bf16.mxu0 0
    %90 = vmatpush1.bf16.msra.mxu0 0
    %91 = vmatprep.subr.bf16.mxu0 0
    %92 = vmatpush1.bf16.msra.mxu0 0
    %93 = vmatprep.subr.bf16.mxu0 0
    %94 = vmatpush1.bf16.msra.mxu0 0
    %95 = vmatprep.mubr.bf16.mxu0 0
    %96 = vmatmul.mubr.bf16.gmra.mrb[0].mxu0 %v61
    %v97 = vpop.f32.mrb[0].mxu0
    %v98 = vadd.f32 %v40, %v97
    %v99 = vpop.f32.mrb[0].mxu0
    %v100 = vpop.f32.mrb[0].mxu0
    %v101 = vadd.f32 %v40, %v100
    %v102 = vpop.f32.mrb[0].mxu0
    %103 = vdwg.mxu0
    %v104 = vtanh.pop %v98
    %v105 = vtanh.pop %v101
    %v106 = vpack.c.bf16 %v105, %v104
    %s107 = scalar_lea.vmem [#allocation2], 64
    %v108 = vld [vmem:[%s107] sm:$0xf]
    %v109 = vld [vmem:[%s107 + $0x4] sm:$0xf]
    %v110 = vld [vmem:[%s107 + $0x8] sm:$0xf]
    %v111 = vld [vmem:[%s107 + $0xc] sm:$0xf]
    %v112 = vld [vmem:[%s107 + $0x10] sm:$0xf]
    %v113 = vld [vmem:[%s107 + $0x14] sm:$0xf]
    %v114 = vld [vmem:[%s107 + $0x18] sm:$0xf]
    %v115 = vld [vmem:[%s107 + $0x1c] sm:$0xf]
    %v116 = vld [vmem:[%s107 + $0x20] sm:$0xf]
    %v117 = vld [vmem:[%s107 + $0x24] sm:$0xf]
    %v118 = vld [vmem:[%s107 + $0x28] sm:$0xf]
    %v119 = vld [vmem:[%s107 + $0x2c] sm:$0xf]
    %v120 = vld [vmem:[%s107 + $0x30] sm:$0xf]
    %v121 = vld [vmem:[%s107 + $0x34] sm:$0xf]
    %v122 = vld [vmem:[%s107 + $0x38] sm:$0xf]
    %v123 = vld [vmem:[%s107 + $0x3c] sm:$0xf]
    %s124 = scalar_lea.vmem %s2, 1
    %v125 = vld [vmem:[%s124] sm:$0x1]
    %v127 = vlaneseq
    %v128 = vshrl.u32 %v127, 7
    %v129 = vsub.s32 0, %v128
    %v130 = vrot.slane %v125, %v129
    %v148 = vunpack.c.l.b16 %v108
    %v149 = vunpack.c.l.b16 %v109
    %v150 = vunpack.c.l.b16 %v110
    %v151 = vunpack.c.l.b16 %v111
    %v152 = vunpack.c.l.b16 %v112
    %v153 = vunpack.c.l.b16 %v113
    %v154 = vunpack.c.l.b16 %v114
    %v155 = vunpack.c.l.b16 %v115
    %v156 = vunpack.c.l.b16 %v116
    %v157 = vunpack.c.l.b16 %v117
    %v158 = vunpack.c.l.b16 %v118
    %v159 = vunpack.c.l.b16 %v119
    %v160 = vunpack.c.l.b16 %v120
    %v161 = vunpack.c.l.b16 %v121
    %v162 = vunpack.c.l.b16 %v122
    %v163 = vunpack.c.l.b16 %v123
    %v164 = vpack.c.b16 %v149, %v148
    %v165 = vpack.c.b16 %v151, %v150
    %v166 = vpack.c.b16 %v153, %v152
    %v167 = vpack.c.b16 %v155, %v154
    %v168 = vpack.c.b16 %v157, %v156
    %v169 = vpack.c.b16 %v159, %v158
    %v170 = vpack.c.b16 %v161, %v160
    %v171 = vpack.c.b16 %v163, %v162
    %180 = vmatprep.subr.bf16.mxu0 0
    %181 = vmatpush1.bf16.msra.mxu0 %v164
    %182 = vmatprep.subr.bf16.mxu0 0
    %183 = vmatpush1.bf16.msra.mxu0 %v165
    %184 = vmatprep.subr.bf16.mxu0 0
    %185 = vmatpush1.bf16.msra.mxu0 %v166
    %186 = vmatprep.subr.bf16.mxu0 0
    %187 = vmatpush1.bf16.msra.mxu0 %v167
    %188 = vmatprep.subr.bf16.mxu0 0
    %189 = vmatpush1.bf16.msra.mxu0 %v168
    %190 = vmatprep.subr.bf16.mxu0 0
    %191 = vmatpush1.bf16.msra.mxu0 %v169
    %192 = vmatprep.subr.bf16.mxu0 0
    %193 = vmatpush1.bf16.msra.mxu0 %v170
    %194 = vmatprep.subr.bf16.mxu0 0
    %195 = vmatpush1.bf16.msra.mxu0 %v171
    %196 = vmatprep.subr.bf16.mxu0 0
    %197 = vmatpush1.bf16.msra.mxu0 0
    %198 = vmatprep.subr.bf16.mxu0 0
    %199 = vmatpush1.bf16.msra.mxu0 0
    %200 = vmatprep.subr.bf16.mxu0 0
    %201 = vmatpush1.bf16.msra.mxu0 0
    %202 = vmatprep.subr.bf16.mxu0 0
    %203 = vmatpush1.bf16.msra.mxu0 0
    %204 = vmatprep.subr.bf16.mxu0 0
    %205 = vmatpush1.bf16.msra.mxu0 0
    %206 = vmatprep.subr.bf16.mxu0 0
    %207 = vmatpush1.bf16.msra.mxu0 0
    %208 = vmatprep.subr.bf16.mxu0 0
    %209 = vmatpush1.bf16.msra.mxu0 0
    %210 = vmatprep.subr.bf16.mxu0 0
    %211 = vmatpush1.bf16.msra.mxu0 0
    %212 = vmatprep.mubr.bf16.mxu0 0
    %213 = vmatmul.mubr.bf16.gmra.mrb[0].mxu0 %v106
    %v214 = vpop.f32.mrb[0].mxu0
    %v215 = vadd.f32 %v130, %v214
    %v216 = vpop.f32.mrb[0].mxu0
    %v217 = vpop.f32.mrb[0].mxu0
    %v218 = vadd.f32 %v130, %v217
    %v219 = vpop.f32.mrb[0].mxu0
    %220 = vdwg.mxu0
    %v221 = vtanh.pop %v215
    %v222 = vtanh.pop %v218
    %v223 = vpack.c.bf16 %v222, %v221
    %s224 = scalar_lea.vmem [#allocation2], 128
    %v225 = vld [vmem:[%s224] sm:$0xf]
    %v226 = vld [vmem:[%s224 + $0x4] sm:$0xf]
    %v227 = vld [vmem:[%s224 + $0x8] sm:$0xf]
    %v228 = vld [vmem:[%s224 + $0xc] sm:$0xf]
    %v229 = vld [vmem:[%s224 + $0x10] sm:$0xf]
    %v230 = vld [vmem:[%s224 + $0x14] sm:$0xf]
    %v231 = vld [vmem:[%s224 + $0x18] sm:$0xf]
    %v232 = vld [vmem:[%s224 + $0x1c] sm:$0xf]
    %v233 = vld [vmem:[%s224 + $0x20] sm:$0xf]
    %v234 = vld [vmem:[%s224 + $0x24] sm:$0xf]
    %v235 = vld [vmem:[%s224 + $0x28] sm:$0xf]
    %v236 = vld [vmem:[%s224 + $0x2c] sm:$0xf]
    %v237 = vld [vmem:[%s224 + $0x30] sm:$0xf]
    %v238 = vld [vmem:[%s224 + $0x34] sm:$0xf]
    %v239 = vld [vmem:[%s224 + $0x38] sm:$0xf]
    %v240 = vld [vmem:[%s224 + $0x3c] sm:$0xf]
    %s241 = scalar_lea.vmem %s2, 2
    %v242 = vld [vmem:[%s241] sm:$0x1]
    %v244 = vlaneseq
    %v245 = vshrl.u32 %v244, 7
    %v246 = vsub.s32 0, %v245
    %v247 = vrot.slane %v242, %v246
    %v265 = vunpack.c.l.b16 %v225
    %v266 = vunpack.c.l.b16 %v226
    %v267 = vunpack.c.l.b16 %v227
    %v268 = vunpack.c.l.b16 %v228
    %v269 = vunpack.c.l.b16 %v229
    %v270 = vunpack.c.l.b16 %v230
    %v271 = vunpack.c.l.b16 %v231
    %v272 = vunpack.c.l.b16 %v232
    %v273 = vunpack.c.l.b16 %v233
    %v274 = vunpack.c.l.b16 %v234
    %v275 = vunpack.c.l.b16 %v235
    %v276 = vunpack.c.l.b16 %v236
    %v277 = vunpack.c.l.b16 %v237
    %v278 = vunpack.c.l.b16 %v238
    %v279 = vunpack.c.l.b16 %v239
    %v280 = vunpack.c.l.b16 %v240
    %v281 = vpack.c.b16 %v266, %v265
    %v282 = vpack.c.b16 %v268, %v267
    %v283 = vpack.c.b16 %v270, %v269
    %v284 = vpack.c.b16 %v272, %v271
    %v285 = vpack.c.b16 %v274, %v273
    %v286 = vpack.c.b16 %v276, %v275
    %v287 = vpack.c.b16 %v278, %v277
    %v288 = vpack.c.b16 %v280, %v279
    %297 = vmatprep.subr.bf16.mxu0 0
    %298 = vmatpush1.bf16.msra.mxu0 %v281
    %299 = vmatprep.subr.bf16.mxu0 0
    %300 = vmatpush1.bf16.msra.mxu0 %v282
    %301 = vmatprep.subr.bf16.mxu0 0
    %302 = vmatpush1.bf16.msra.mxu0 %v283
    %303 = vmatprep.subr.bf16.mxu0 0
    %304 = vmatpush1.bf16.msra.mxu0 %v284
    %305 = vmatprep.subr.bf16.mxu0 0
    %306 = vmatpush1.bf16.msra.mxu0 %v285
    %307 = vmatprep.subr.bf16.mxu0 0
    %308 = vmatpush1.bf16.msra.mxu0 %v286
    %309 = vmatprep.subr.bf16.mxu0 0
    %310 = vmatpush1.bf16.msra.mxu0 %v287
    %311 = vmatprep.subr.bf16.mxu0 0
    %312 = vmatpush1.bf16.msra.mxu0 %v288
    %313 = vmatprep.subr.bf16.mxu0 0
    %314 = vmatpush1.bf16.msra.mxu0 0
    %315 = vmatprep.subr.bf16.mxu0 0
    %316 = vmatpush1.bf16.msra.mxu0 0
    %317 = vmatprep.subr.bf16.mxu0 0
    %318 = vmatpush1.bf16.msra.mxu0 0
    %319 = vmatprep.subr.bf16.mxu0 0
    %320 = vmatpush1.bf16.msra.mxu0 0
    %321 = vmatprep.subr.bf16.mxu0 0
    %322 = vmatpush1.bf16.msra.mxu0 0
    %323 = vmatprep.subr.bf16.mxu0 0
    %324 = vmatpush1.bf16.msra.mxu0 0
    %325 = vmatprep.subr.bf16.mxu0 0
    %326 = vmatpush1.bf16.msra.mxu0 0
    %327 = vmatprep.subr.bf16.mxu0 0
    %328 = vmatpush1.bf16.msra.mxu0 0
    %329 = vmatprep.mubr.bf16.mxu0 0
    %330 = vmatmul.mubr.bf16.gmra.mrb[0].mxu0 %v223
    %v331 = vpop.f32.mrb[0].mxu0
    %v332 = vadd.f32 %v247, %v331
    %v333 = vpop.f32.mrb[0].mxu0
    %v334 = vpop.f32.mrb[0].mxu0
    %v335 = vadd.f32 %v247, %v334
    %v336 = vpop.f32.mrb[0].mxu0
    %337 = vdwg.mxu0
    %338 = vmax.xlane.f32.xlu0 %v332
    %v339 = vpop.xlane.xlu0 %338
    %340 = vmax.xlane.f32.xlu0 %v335
    %v341 = vpop.xlane.xlu0 %340
    %v342 = vsub.f32 %v332, %v339
    %v343 = vsub.f32 %v335, %v341
    %v344 = vmul.f32 %v342, 1.442695
    %v345 = vpow.pop %v344
    %v346 = vmul.f32 %v343, 1.442695
    %v347 = vpow.pop %v346
    %348 = vadd.xlane.f32.xlu0 %v345
    %v349 = vpop.xlane.xlu0 %348
    %350 = vadd.xlane.f32.xlu0 %v347
    %v351 = vpop.xlane.xlu0 %350
    %v352 = vrcp.pop %v349
    %v353 = vmul.f32 %v345, %v352
    %v354 = vrcp.pop %v351
    %v355 = vmul.f32 %v347, %v354
    %356 = vst [vmem:[%s3] sm:$0xff] %v353
    %357 = vst [vmem:[%s3 + $0x8] sm:$0xff] %v355
    // Predicated region
    $region18: #{simplenet_forward_batched.1} parent=1 // pred_check
      _
    $region19: #{simplenet_forward_batched.1} parent=1 // pred_check_branch
      %359 = sbr.rel (0) target = $region21
    $region20: #{simplenet_forward_batched.1} parent=1 // pred_region
      _
    $region21: #{simplenet_forward_batched.1} parent=1 // pred_fallthru
      _
    // Predicated region
    $region22: #{simplenet_forward_batched.1} parent=1 // pred_check
      _
    $region23: #{simplenet_forward_batched.1} parent=1 // pred_check_branch
      %361 = sbr.rel (0) target = $region25
    $region24: #{simplenet_forward_batched.1} parent=1 // pred_region
      _
    $region25: #{simplenet_forward_batched.1} parent=1 // pred_fallthru
      _
    %362 = vsyncpa [#allocation3], 1

</llo_original>
